<compile_context>
chip_gen: v6e
topology: v6e:2x2x1
jax: 0.10.0
libtpu: 0.0.40
codegen_flags: <defaults>
</compile_context>

<pallas_src>
import math

import jax
import jax.numpy as jnp
from jax.experimental import pallas as pl
from jax.experimental.pallas import tpu as pltpu  # noqa: F401  (kept for TPU-specific tuning hooks)

OBJ_BBOXES_NUM = 5
LANE = 128


# ----------------------------- Pallas kernel ------------------------------- #

def critic_fused_kernel(nodes_ref, act_ref, wg_ref, bg_ref,
                        w1e_ref, w1a_ref, b1_ref,
                        w2_ref, b2_ref, w3p_ref, b3p_ref, o_ref):
    # synthetic graph_model_critic: per-node linear embedding of the robot rows
    # TODO(synk): the real graph_model_critic is an arbitrary injected GNN; it
    # is approximated here by a single linear node embedding.
    emb = (
        jnp.dot(nodes_ref[...], wg_ref[...], preferred_element_type=jnp.float32)
        + bg_ref[...]
    )
    # concat-free first layer: [emb | action] @ w1 == emb @ w1_emb + action @ w1_act
    h1 = jnp.maximum(
        jnp.dot(emb, w1e_ref[...], preferred_element_type=jnp.float32)
        + jnp.dot(act_ref[...], w1a_ref[...], preferred_element_type=jnp.float32)
        + b1_ref[...],
        0.0,
    )
    h2 = jnp.maximum(
        jnp.dot(h1, w2_ref[...], preferred_element_type=jnp.float32) + b2_ref[...],
        0.0,
    )
    # lane-dense (rows, 128)-padded output slab; wrapper slices the real columns.
    o_ref[...] = (
        jnp.dot(h2, w3p_ref[...], preferred_element_type=jnp.float32) + b3p_ref[...]
    )


# ------------------------------ Wrapper ------------------------------------ #

def _full_spec(shape):
    # whole-array block, single grid point; shapes are tiny (Mosaic pads to
    # (8, 128) tiles internally).  When this model is scaled up, add a row grid
    # with dimension_semantics=("parallel",) and bf16 operands.
    return pl.BlockSpec(shape, lambda: tuple(0 for _ in shape))


def critic_network_graph_forward(state_goals, state_graph_nodes, action, params):
    """Reproduces CriticNetworkGraph.forward.

    state_goals:        unused by the forward math (only used for error prints
                        in the original).
    state_graph_nodes:  [total_len * OBJ_BBOXES_NUM, node_feat] node features
                        fed to the (synthetic) graph_model_critic.
    action:             [total_len, act_dim]
    """
    wg, bg = params["graph"], params["graph_bias"]
    w1, b1, w2, b2, w3, b3 = params["mlp"]
    total_len = action.shape[0]
    emb_dim = wg.shape[1]
    n_output = w3.shape[1]

    # torch.index_select(state_embedding, 0, robot_ids) pulled BEFORE the embed:
    # 5x fewer embed FLOPs and node-feature DMA.
    # TODO(synk): only equivalent because the synthetic graph model is per-node
    # linear; a real message-passing GNN needs all OBJ_BBOXES_NUM nodes first.
    robot_nodes = state_graph_nodes[::OBJ_BBOXES_NUM].astype(jnp.float32)

    # concat elimination: split w1 row-wise into emb / action halves.
    w1_emb, w1_act = w1[:emb_dim], w1[emb_dim:]

    # lane-dense output: zero-pad the last layer's output dim up to 128 lanes.
    n_out_pad = max(LANE, ((n_output + LANE - 1) // LANE) * LANE)
    w3_pad = jnp.zeros((w3.shape[0], n_out_pad), jnp.float32).at[:, :n_output].set(w3)
    b3_pad = jnp.zeros((1, n_out_pad), jnp.float32).at[:, :n_output].set(b3)

    action_f = action.astype(jnp.float32)

    args = (robot_nodes, action_f, wg, bg, w1_emb, w1_act, b1, w2, b2, w3_pad, b3_pad)
    q_pad = pl.pallas_call(
        critic_fused_kernel,
        out_shape=jax.ShapeDtypeStruct((total_len, n_out_pad), jnp.float32),
        in_specs=[_full_spec(a.shape) for a in args],
        out_specs=_full_spec((total_len, n_out_pad)),
    )(*args)

    q = q_pad[:, :n_output]          # slice back to the real critic head
    return jnp.squeeze(q)            # torch.squeeze(q)


# ------------------------- Deterministic init ------------------------------ #

def xavier_uniform(key, fan_in, fan_out, gain):
    bound = gain * math.sqrt(6.0 / (fan_in + fan_out))
    # stored as (in, out): kernel computes x @ W
    return jax.random.uniform(key, (fan_in, fan_out), jnp.float32, -bound, bound)


def torch_bias(key, fan_in, fan_out):
    bound = 1.0 / math.sqrt(fan_in)
    return jax.random.uniform(key, (1, fan_out), jnp.float32, -bound, bound)


def make_params(key, node_feat, emb_dim, act_dim, n_features, n_output):
    n_input = emb_dim + act_dim
    ks = jax.random.split(key, 8)
    gain_relu = math.sqrt(2.0)
    params = {
        "graph": xavier_uniform(ks[0], node_feat, emb_dim, 1.0),
        "graph_bias": torch_bias(ks[1], node_feat, emb_dim),
        "mlp": (
            xavier_uniform(ks[2], n_input, n_features, gain_relu),
            torch_bias(ks[3], n_input, n_features),
            xavier_uniform(ks[4], n_features, n_features, gain_relu),
            torch_bias(ks[5], n_features, n_features),
            xavier_uniform(ks[6], n_features, n_output, 1.0),
            torch_bias(ks[7], n_features, n_output),
        ),
    }
    return params


# ------------------------------- Main --------------------------------------- #

if __name__ == "__main__":
    key = jax.random.PRNGKey(0)
    kp, kg, kn, ka = jax.random.split(key, 4)

    # small shapes consistent with the forward pass
    total_len = 2          # batch (action.shape[0])
    node_feat = 16         # graph node feature dim
    emb_dim = 32           # graph_model_critic output dim
    act_dim = 8            # action dim
    n_features = 32        # hidden width
    n_output = 1           # critic output

    params = make_params(kp, node_feat, emb_dim, act_dim, n_features, n_output)

    state_goals = jax.random.normal(kg, (total_len, 8), jnp.float32)          # unused
    state_graph_nodes = jax.random.normal(
        kn, (total_len * OBJ_BBOXES_NUM, node_feat), jnp.float32
    )
    action = jax.random.normal(ka, (total_len, act_dim), jnp.float32)

    q = critic_network_graph_forward(state_goals, state_graph_nodes, action, params)
    q = jax.block_until_ready(q)

    # pure-JAX reference check (full embed + index_select, exactly as the module)
    wg, bg = params["graph"], params["graph_bias"]
    w1, b1, w2, b2, w3, b3 = params["mlp"]
    emb = state_graph_nodes @ wg + bg
    sel = emb[jnp.arange(0, total_len * OBJ_BBOXES_NUM, OBJ_BBOXES_NUM)]
    sa = jnp.concatenate([sel, action], axis=1)
    ref = jnp.squeeze(
        jnp.maximum(jnp.maximum(sa @ w1 + b1, 0.0) @ w2 + b2, 0.0) @ w3 + b3
    )
    assert q.shape == (total_len,), q.shape
    assert jnp.allclose(q, ref, atol=1e-5, rtol=1e-5), (q, ref)

    print("KERNEL_OK")
</pallas_src>

<mosaic_0001>
module attributes {stable_mosaic.version = 11 : i64} {
  func.func @critic_fused_kernel(%arg0: memref<2x16xf32, #tpu.memory_space<vmem>>, %arg1: memref<2x8xf32, #tpu.memory_space<vmem>>, %arg2: memref<16x32xf32, #tpu.memory_space<vmem>>, %arg3: memref<1x32xf32, #tpu.memory_space<vmem>>, %arg4: memref<32x32xf32, #tpu.memory_space<vmem>>, %arg5: memref<8x32xf32, #tpu.memory_space<vmem>>, %arg6: memref<1x32xf32, #tpu.memory_space<vmem>>, %arg7: memref<32x32xf32, #tpu.memory_space<vmem>>, %arg8: memref<1x32xf32, #tpu.memory_space<vmem>>, %arg9: memref<32x128xf32, #tpu.memory_space<vmem>>, %arg10: memref<1x128xf32, #tpu.memory_space<vmem>>, %arg11: memref<2x128xf32, #tpu.memory_space<vmem>>) attributes {dimension_semantics = [], scalar_prefetch = 0 : i64, scratch_operands = 0 : i64, tpu.core_type = #tpu.core_type<tc>} {
    %c0 = arith.constant 0 : index
    %c0_0 = arith.constant 0 : index
    %0 = vector.load %arg0[%c0, %c0_0] : memref<2x16xf32, #tpu.memory_space<vmem>>, vector<2x16xf32>
    %c0_1 = arith.constant 0 : index
    %c0_2 = arith.constant 0 : index
    %1 = vector.load %arg2[%c0_1, %c0_2] : memref<16x32xf32, #tpu.memory_space<vmem>>, vector<16x32xf32>
    %cst = arith.constant dense<0.000000e+00> : vector<2x32xf32>
    %2 = tpu.matmul %0, %1, %cst {dimension_numbers = #tpu.dot_dimension_numbers<[1], [0], [0], [1], [0, 0, 1, 1], [], []>} : vector<2x16xf32>, vector<16x32xf32>, vector<2x32xf32> -> vector<2x32xf32>
    %c0_3 = arith.constant 0 : index
    %c0_4 = arith.constant 0 : index
    %3 = vector.load %arg3[%c0_3, %c0_4] : memref<1x32xf32, #tpu.memory_space<vmem>>, vector<1x32xf32>
    %4 = vector.broadcast %3 : vector<1x32xf32> to vector<2x32xf32>
    %5 = arith.addf %2, %4 : vector<2x32xf32>
    %c0_5 = arith.constant 0 : index
    %c0_6 = arith.constant 0 : index
    %6 = vector.load %arg4[%c0_5, %c0_6] : memref<32x32xf32, #tpu.memory_space<vmem>>, vector<32x32xf32>
    %cst_7 = arith.constant dense<0.000000e+00> : vector<2x32xf32>
    %7 = tpu.matmul %5, %6, %cst_7 {dimension_numbers = #tpu.dot_dimension_numbers<[1], [0], [0], [1], [0, 0, 1, 1], [], []>} : vector<2x32xf32>, vector<32x32xf32>, vector<2x32xf32> -> vector<2x32xf32>
    %c0_8 = arith.constant 0 : index
    %c0_9 = arith.constant 0 : index
    %8 = vector.load %arg1[%c0_8, %c0_9] : memref<2x8xf32, #tpu.memory_space<vmem>>, vector<2x8xf32>
    %c0_10 = arith.constant 0 : index
    %c0_11 = arith.constant 0 : index
    %9 = vector.load %arg5[%c0_10, %c0_11] : memref<8x32xf32, #tpu.memory_space<vmem>>, vector<8x32xf32>
    %cst_12 = arith.constant dense<0.000000e+00> : vector<2x32xf32>
    %10 = tpu.matmul %8, %9, %cst_12 {dimension_numbers = #tpu.dot_dimension_numbers<[1], [0], [0], [1], [0, 0, 1, 1], [], []>} : vector<2x8xf32>, vector<8x32xf32>, vector<2x32xf32> -> vector<2x32xf32>
    %11 = arith.addf %7, %10 : vector<2x32xf32>
    %c0_13 = arith.constant 0 : index
    %c0_14 = arith.constant 0 : index
    %12 = vector.load %arg6[%c0_13, %c0_14] : memref<1x32xf32, #tpu.memory_space<vmem>>, vector<1x32xf32>
    %13 = vector.broadcast %12 : vector<1x32xf32> to vector<2x32xf32>
    %14 = arith.addf %11, %13 : vector<2x32xf32>
    %cst_15 = arith.constant 0.000000e+00 : f32
    %15 = vector.broadcast %cst_15 : f32 to vector<2x32xf32>
    %16 = arith.maximumf %14, %15 : vector<2x32xf32>
    %c0_16 = arith.constant 0 : index
    %c0_17 = arith.constant 0 : index
    %17 = vector.load %arg7[%c0_16, %c0_17] : memref<32x32xf32, #tpu.memory_space<vmem>>, vector<32x32xf32>
    %cst_18 = arith.constant dense<0.000000e+00> : vector<2x32xf32>
    %18 = tpu.matmul %16, %17, %cst_18 {dimension_numbers = #tpu.dot_dimension_numbers<[1], [0], [0], [1], [0, 0, 1, 1], [], []>} : vector<2x32xf32>, vector<32x32xf32>, vector<2x32xf32> -> vector<2x32xf32>
    %c0_19 = arith.constant 0 : index
    %c0_20 = arith.constant 0 : index
    %19 = vector.load %arg8[%c0_19, %c0_20] : memref<1x32xf32, #tpu.memory_space<vmem>>, vector<1x32xf32>
    %20 = vector.broadcast %19 : vector<1x32xf32> to vector<2x32xf32>
    %21 = arith.addf %18, %20 : vector<2x32xf32>
    %cst_21 = arith.constant 0.000000e+00 : f32
    %22 = vector.broadcast %cst_21 : f32 to vector<2x32xf32>
    %23 = arith.maximumf %21, %22 : vector<2x32xf32>
    %c0_22 = arith.constant 0 : index
    %c0_23 = arith.constant 0 : index
    %24 = vector.load %arg9[%c0_22, %c0_23] : memref<32x128xf32, #tpu.memory_space<vmem>>, vector<32x128xf32>
    %cst_24 = arith.constant dense<0.000000e+00> : vector<2x128xf32>
    %25 = tpu.matmul %23, %24, %cst_24 {dimension_numbers = #tpu.dot_dimension_numbers<[1], [0], [0], [1], [0, 0, 1, 1], [], []>} : vector<2x32xf32>, vector<32x128xf32>, vector<2x128xf32> -> vector<2x128xf32>
    %c0_25 = arith.constant 0 : index
    %c0_26 = arith.constant 0 : index
    %26 = vector.load %arg10[%c0_25, %c0_26] : memref<1x128xf32, #tpu.memory_space<vmem>>, vector<1x128xf32>
    %27 = vector.broadcast %26 : vector<1x128xf32> to vector<2x128xf32>
    %28 = arith.addf %25, %27 : vector<2x128xf32>
    %c0_27 = arith.constant 0 : index
    %c0_28 = arith.constant 0 : index
    %29 = vector.load %arg11[%c0_27, %c0_28] : memref<2x128xf32, #tpu.memory_space<vmem>>, vector<2x128xf32>
    tpu.vector_store %arg11[%c0_27, %c0_28], %28 {strides = array<i32>} : memref<2x128xf32, #tpu.memory_space<vmem>>, vector<2x128xf32>,
    return
  }
}

</mosaic_0001>

<llo_original>
// kernel: tpu_custom_call.1
$region0: #{tpu_custom_call.1}
  #allocation0 [shape = 'u32[]', space=smem, size = 0x4, offset = 0x4, fixed_abs, tag = 'smem constant byte address 0x4 - core index']
  #allocation1 [shape = 'u32[144,128]{1,0:T(1,128)}', space=vmem, size = 0x12000, scoped, tag = 'internal scratch']
  %s0 = inlined_call_operand.hbm [shape: f32[2,16], index: 0, kind: input, shape index: {}]
  %s1 = inlined_call_operand.hbm [shape: f32[2,8], index: 1, kind: input, shape index: {}]
  %s2 = inlined_call_operand.hbm [shape: f32[16,32], index: 2, kind: input, shape index: {}]
  %s3 = inlined_call_operand.vmem [shape: f32[1,32], index: 3, kind: input, shape index: {}]
  %s4 = inlined_call_operand.hbm [shape: f32[32,32], index: 4, kind: input, shape index: {}]
  %s5 = inlined_call_operand.vmem [shape: f32[8,32], index: 5, kind: input, shape index: {}]
  %s6 = inlined_call_operand.vmem [shape: f32[1,32], index: 6, kind: input, shape index: {}]
  %s7 = inlined_call_operand.hbm [shape: f32[32,32], index: 7, kind: input, shape index: {}]
  %s8 = inlined_call_operand.vmem [shape: f32[1,32], index: 8, kind: input, shape index: {}]
  %s9 = inlined_call_operand.hbm [shape: f32[32,128], index: 9, kind: input, shape index: {}]
  %s10 = inlined_call_operand.vmem [shape: f32[1,128], index: 10, kind: input, shape index: {}]
  %s11 = inlined_call_operand.hbm [shape: f32[2,128], index: 11, kind: output, shape index: {}]
  %s12 = sld [smem:[#allocation0]]
  $region78: #{tpu_custom_call.1} parent=0
    _
  %s14 = ssub.s32 1, %s12
  %s15 = scalar_select 0, %s14, %s12
  $region1: #{tpu_custom_call.1} parent=0
    #allocation2 [shape = 'u8[1024]{0}', space=vmem, size = 0x400, scoped, tag = 'input window, operand 0, single buffered']
    #allocation3 [shape = 's32[1]{0}', space=sflag, size = 0x4, scoped, tag = 'scoped memory for tpu_custom_call.1']
    #allocation4 [shape = 's32[1]{0}', space=sflag, size = 0x4, scoped, tag = 'scoped memory for tpu_custom_call.1']
    #allocation5 [shape = 'u8[1024]{0}', space=vmem, size = 0x400, scoped, tag = 'input window, operand 1, single buffered']
    #allocation6 [shape = 's32[1]{0}', space=sflag, size = 0x4, scoped, tag = 'scoped memory for tpu_custom_call.1']
    #allocation7 [shape = 'u8[8192]{0}', space=vmem, size = 0x2000, scoped, tag = 'input window, operand 2, single buffered']
    #allocation8 [shape = 'u8[16384]{0}', space=vmem, size = 0x4000, scoped, tag = 'input window, operand 4, single buffered']
    #allocation9 [shape = 's32[1]{0}', space=sflag, size = 0x4, scoped, tag = 'scoped memory for tpu_custom_call.1']
    #allocation10 [shape = 'u8[16384]{0}', space=vmem, size = 0x4000, scoped, tag = 'input window, operand 7, single buffered']
    #allocation11 [shape = 'u8[16384]{0}', space=vmem, size = 0x4000, scoped, tag = 'input window, operand 9, single buffered']
    #allocation12 [shape = 's32[1]{0}', space=sflag, size = 0x4, scoped, tag = 'scoped memory for tpu_custom_call.1']
    #allocation13 [shape = 'u8[1024]{0}', space=vmem, size = 0x400, scoped, tag = 'output window, operand 0, single buffered']
    %16 = vsyncpa [#allocation3], 0
    %17 = vsyncpa [#allocation6], 0
    %18 = vsyncpa [#allocation9], 0
    %19 = vsyncpa [#allocation12], 0
    %20 = vsyncpa [#allocation4], 0
    // Predicated region
    $region2: #{tpu_custom_call.1} parent=1 // pred_check
      _
    $region3: #{tpu_custom_call.1} parent=1 // pred_check_branch
      %22 = sbr.rel (0) target = $region5
    $region4: #{tpu_custom_call.1} parent=1 // pred_region
      %s24 = ssub.s32 32, 32
      %25 = vsyncadd [#allocation3], %s24
      %s27 = sshll.u32 [#allocation2], 4
      %s28 = int_to_ptr.vmem [resolvable:$true] %s27
      %30 = dma.hbm_to_vmem [thread:$0]  %s0, 32, %s28, [#allocation3]
    $region5: #{tpu_custom_call.1} parent=1 // pred_fallthru
      _
    // Predicated region
    $region6: #{tpu_custom_call.1} parent=1 // pred_check
      _
    $region7: #{tpu_custom_call.1} parent=1 // pred_check_branch
      %32 = sbr.rel (0) target = $region9
    $region8: #{tpu_custom_call.1} parent=1 // pred_region
      %s34 = ssub.s32 32, 32
      %35 = vsyncadd [#allocation6], %s34
      %s37 = sshll.u32 [#allocation5], 4
      %s38 = int_to_ptr.vmem [resolvable:$true] %s37
      %40 = dma.hbm_to_vmem [thread:$0]  %s1, 32, %s38, [#allocation6]
    $region9: #{tpu_custom_call.1} parent=1 // pred_fallthru
      _
    // Predicated region
    $region10: #{tpu_custom_call.1} parent=1 // pred_check
      _
    $region11: #{tpu_custom_call.1} parent=1 // pred_check_branch
      %42 = sbr.rel (0) target = $region13
    $region12: #{tpu_custom_call.1} parent=1 // pred_region
      %s44 = ssub.s32 256, 256
      %45 = vsyncadd [#allocation6], %s44
      %s46 = sshll.u32 [#allocation7], 4
      %s47 = int_to_ptr.vmem [resolvable:$true] %s46
      %52 = dma.hbm_to_vmem [thread:$0]  %s2, 256, %s47, [#allocation6], 128, 128, 8
    $region13: #{tpu_custom_call.1} parent=1 // pred_fallthru
      _
    // Predicated region
    $region14: #{tpu_custom_call.1} parent=1 // pred_check
      _
    $region15: #{tpu_custom_call.1} parent=1 // pred_check_branch
      %54 = sbr.rel (0) target = $region17
    $region16: #{tpu_custom_call.1} parent=1 // pred_region
      _
    $region17: #{tpu_custom_call.1} parent=1 // pred_fallthru
      _
    // Predicated region
    $region18: #{tpu_custom_call.1} parent=1 // pred_check
      _
    $region19: #{tpu_custom_call.1} parent=1 // pred_check_branch
      %56 = sbr.rel (0) target = $region21
    $region20: #{tpu_custom_call.1} parent=1 // pred_region
      %s58 = ssub.s32 512, 512
      %59 = vsyncadd [#allocation9], %s58
      %s60 = sshll.u32 [#allocation8], 4
      %s61 = int_to_ptr.vmem [resolvable:$true] %s60
      %66 = dma.hbm_to_vmem [thread:$0]  %s4, 512, %s61, [#allocation9], 128, 128, 8
    $region21: #{tpu_custom_call.1} parent=1 // pred_fallthru
      _
    // Predicated region
    $region22: #{tpu_custom_call.1} parent=1 // pred_check
      _
    $region23: #{tpu_custom_call.1} parent=1 // pred_check_branch
      %68 = sbr.rel (0) target = $region25
    $region24: #{tpu_custom_call.1} parent=1 // pred_region
      _
    $region25: #{tpu_custom_call.1} parent=1 // pred_fallthru
      _
    // Predicated region
    $region26: #{tpu_custom_call.1} parent=1 // pred_check
      _
    $region27: #{tpu_custom_call.1} parent=1 // pred_check_branch
      %70 = sbr.rel (0) target = $region29
    $region28: #{tpu_custom_call.1} parent=1 // pred_region
      _
    $region29: #{tpu_custom_call.1} parent=1 // pred_fallthru
      _
    // Predicated region
    $region30: #{tpu_custom_call.1} parent=1 // pred_check
      _
    $region31: #{tpu_custom_call.1} parent=1 // pred_check_branch
      %72 = sbr.rel (0) target = $region33
    $region32: #{tpu_custom_call.1} parent=1 // pred_region
      %s74 = ssub.s32 512, 512
      %75 = vsyncadd [#allocation9], %s74
      %s76 = sshll.u32 [#allocation10], 4
      %s77 = int_to_ptr.vmem [resolvable:$true] %s76
      %82 = dma.hbm_to_vmem [thread:$0]  %s7, 512, %s77, [#allocation9], 128, 128, 8
    $region33: #{tpu_custom_call.1} parent=1 // pred_fallthru
      _
    // Predicated region
    $region34: #{tpu_custom_call.1} parent=1 // pred_check
      _
    $region35: #{tpu_custom_call.1} parent=1 // pred_check_branch
      %84 = sbr.rel (0) target = $region37
    $region36: #{tpu_custom_call.1} parent=1 // pred_region
      _
    $region37: #{tpu_custom_call.1} parent=1 // pred_fallthru
      _
    // Predicated region
    $region38: #{tpu_custom_call.1} parent=1 // pred_check
      _
    $region39: #{tpu_custom_call.1} parent=1 // pred_check_branch
      %86 = sbr.rel (0) target = $region41
    $region40: #{tpu_custom_call.1} parent=1 // pred_region
      %s88 = ssub.s32 512, 512
      %89 = vsyncadd [#allocation12], %s88
      %s90 = sshll.u32 [#allocation11], 4
      %s91 = int_to_ptr.vmem [resolvable:$true] %s90
      %96 = dma.hbm_to_vmem [thread:$0]  %s9, 512, %s91, [#allocation12], 128, 128, 8
    $region41: #{tpu_custom_call.1} parent=1 // pred_fallthru
      _
    // Predicated region
    $region42: #{tpu_custom_call.1} parent=1 // pred_check
      _
    $region43: #{tpu_custom_call.1} parent=1 // pred_check_branch
      %98 = sbr.rel (0) target = $region45
    $region44: #{tpu_custom_call.1} parent=1 // pred_region
      _
    $region45: #{tpu_custom_call.1} parent=1 // pred_fallthru
      _
    // Predicated region
    $region46: #{tpu_custom_call.1} parent=1 // pred_check
      _
    $region47: #{tpu_custom_call.1} parent=1 // pred_check_branch
      %100 = sbr.rel (0) target = $region49
    $region48: #{tpu_custom_call.1} parent=1 // pred_region
      %101 = dma.done [#allocation3], 32
    $region49: #{tpu_custom_call.1} parent=1 // pred_fallthru
      _
    // Predicated region
    $region50: #{tpu_custom_call.1} parent=1 // pred_check
      _
    $region51: #{tpu_custom_call.1} parent=1 // pred_check_branch
      %103 = sbr.rel (0) target = $region53
    $region52: #{tpu_custom_call.1} parent=1 // pred_region
      %104 = dma.done [#allocation6], 32
    $region53: #{tpu_custom_call.1} parent=1 // pred_fallthru
      _
    // Predicated region
    $region54: #{tpu_custom_call.1} parent=1 // pred_check
      _
    $region55: #{tpu_custom_call.1} parent=1 // pred_check_branch
      %106 = sbr.rel (0) target = $region57
    $region56: #{tpu_custom_call.1} parent=1 // pred_region
      %107 = dma.done [#allocation6], 256
    $region57: #{tpu_custom_call.1} parent=1 // pred_fallthru
      _
    // Predicated region
    $region58: #{tpu_custom_call.1} parent=1 // pred_check
      _
    $region59: #{tpu_custom_call.1} parent=1 // pred_check_branch
      %109 = sbr.rel (0) target = $region61
    $region60: #{tpu_custom_call.1} parent=1 // pred_region
      %110 = dma.done [#allocation9], 512
    $region61: #{tpu_custom_call.1} parent=1 // pred_fallthru
      _
    // Predicated region
    $region62: #{tpu_custom_call.1} parent=1 // pred_check
      _
    $region63: #{tpu_custom_call.1} parent=1 // pred_check_branch
      %112 = sbr.rel (0) target = $region65
    $region64: #{tpu_custom_call.1} parent=1 // pred_region
      %113 = dma.done [#allocation9], 512
    $region65: #{tpu_custom_call.1} parent=1 // pred_fallthru
      _
    // Predicated region
    $region66: #{tpu_custom_call.1} parent=1 // pred_check
      _
    $region67: #{tpu_custom_call.1} parent=1 // pred_check_branch
      %115 = sbr.rel (0) target = $region69
    $region68: #{tpu_custom_call.1} parent=1 // pred_region
      %116 = dma.done [#allocation12], 512
    $region69: #{tpu_custom_call.1} parent=1 // pred_fallthru
      _
    %v117 = vld [vmem:[#allocation2] sm:$0x3]
    %v118 = vld [vmem:[#allocation7] sm:$0xff]
    %v119 = vld [vmem:[#allocation7 + $0x8] sm:$0xff]
    %v120 = vld [vmem:[%s3] sm:$0x1]
    %v122 = vlaneseq
    %v123 = vshrl.u32 %v122, 7
    %v124 = vsub.s32 0, %v123
    %v125 = vrot.slane %v120, %v124
    %vm127 = vcmask 130048
    %v129 = vsel %vm127, %v117, 0
    %131 = vmatprep.subr.mxu0 0.0
    %132 = vmatpush1.msra.mxu0 0.0
    %133 = vmatprep.subr.mxu0 0.0
    %134 = vmatpush1.msra.mxu0 0.0
    %135 = vmatprep.subr.mxu0 0.0
    %136 = vmatpush1.msra.mxu0 0.0
    %137 = vmatprep.subr.mxu0 0.0
    %138 = vmatpush1.msra.mxu0 0.0
    %139 = vmatprep.subr.mxu0 0.0
    %140 = vmatpush1.msra.mxu0 0.0
    %141 = vmatprep.subr.mxu0 0.0
    %142 = vmatpush1.msra.mxu0 0.0
    %143 = vmatprep.subr.mxu0 0.0
    %144 = vmatpush1.msra.mxu0 0.0
    %145 = vmatprep.subr.mxu0 0.0
    %146 = vmatpush1.msra.mxu0 0.0
    %147 = vmatprep.subr.mxu0 0.0
    %148 = vmatpush1.msra.mxu0 0.0
    %149 = vmatprep.subr.mxu0 0.0
    %150 = vmatpush1.msra.mxu0 0.0
    %151 = vmatprep.subr.mxu0 0.0
    %152 = vmatpush1.msra.mxu0 0.0
    %153 = vmatprep.subr.mxu0 0.0
    %154 = vmatpush1.msra.mxu0 0.0
    %155 = vmatprep.subr.mxu0 0.0
    %156 = vmatpush1.msra.mxu0 0.0
    %157 = vmatprep.subr.mxu0 0.0
    %158 = vmatpush1.msra.mxu0 0.0
    %159 = vmatprep.subr.mxu0 0.0
    %160 = vmatpush1.msra.mxu0 %v119
    %161 = vmatprep.subr.mxu0 0.0
    %162 = vmatpush1.msra.mxu0 %v118
    %163 = vmatprep.subr.mxu0 0.0
    %164 = vmatpush2.msra.mxu0 0.0
    %165 = vmatprep.subr.mxu0 0.0
    %166 = vmatpush2.msra.mxu0 0.0
    %167 = vmatprep.subr.mxu0 0.0
    %168 = vmatpush2.msra.mxu0 0.0
    %169 = vmatprep.subr.mxu0 0.0
    %170 = vmatpush2.msra.mxu0 0.0
    %171 = vmatprep.subr.mxu0 0.0
    %172 = vmatpush2.msra.mxu0 0.0
    %173 = vmatprep.subr.mxu0 0.0
    %174 = vmatpush2.msra.mxu0 0.0
    %175 = vmatprep.subr.mxu0 0.0
    %176 = vmatpush2.msra.mxu0 0.0
    %177 = vmatprep.subr.mxu0 0.0
    %178 = vmatpush2.msra.mxu0 0.0
    %179 = vmatprep.subr.mxu0 0.0
    %180 = vmatpush2.msra.mxu0 0.0
    %181 = vmatprep.subr.mxu0 0.0
    %182 = vmatpush2.msra.mxu0 0.0
    %183 = vmatprep.subr.mxu0 0.0
    %184 = vmatpush2.msra.mxu0 0.0
    %185 = vmatprep.subr.mxu0 0.0
    %186 = vmatpush2.msra.mxu0 0.0
    %187 = vmatprep.subr.mxu0 0.0
    %188 = vmatpush2.msra.mxu0 0.0
    %189 = vmatprep.subr.mxu0 0.0
    %190 = vmatpush2.msra.mxu0 0.0
    %191 = vmatprep.subr.mxu0 0.0
    %192 = vmatpush2.msra.mxu0 0.0
    %193 = vmatprep.subr.mxu0 0.0
    %194 = vmatpush2.msra.mxu0 0.0
    %195 = vmatprep.mubr.f32.mxu0 0.0
    %196 = vmatmul.mubr.f32.gmra.mxu0 %v129
    %v197 = vpop.f32.mrf.mxu0
    %v198 = vadd.f32 %v125, %v197
    %v199 = vpop.f32.mrf.mxu0
    %200 = vdwg.mxu0
    %v201 = vld [vmem:[#allocation8] sm:$0xff]
    %v202 = vld [vmem:[#allocation8 + $0x8] sm:$0xff]
    %v203 = vld [vmem:[#allocation8 + $0x10] sm:$0xff]
    %v204 = vld [vmem:[#allocation8 + $0x18] sm:$0xff]
    %v205 = vld [vmem:[#allocation5] sm:$0x3]
    %v206 = vld [vmem:[%s5] sm:$0xff]
    %vm207 = vcmask 64512
    %v209 = vsel %vm207, %v205, 0
    %211 = vmatprep.subr.mxu0 0.0
    %212 = vmatpush1.msra.mxu0 0.0
    %213 = vmatprep.subr.mxu0 0.0
    %214 = vmatpush1.msra.mxu0 0.0
    %215 = vmatprep.subr.mxu0 0.0
    %216 = vmatpush1.msra.mxu0 0.0
    %217 = vmatprep.subr.mxu0 0.0
    %218 = vmatpush1.msra.mxu0 0.0
    %219 = vmatprep.subr.mxu0 0.0
    %220 = vmatpush1.msra.mxu0 0.0
    %221 = vmatprep.subr.mxu0 0.0
    %222 = vmatpush1.msra.mxu0 0.0
    %223 = vmatprep.subr.mxu0 0.0
    %224 = vmatpush1.msra.mxu0 0.0
    %225 = vmatprep.subr.mxu0 0.0
    %226 = vmatpush1.msra.mxu0 0.0
    %227 = vmatprep.subr.mxu0 0.0
    %228 = vmatpush1.msra.mxu0 0.0
    %229 = vmatprep.subr.mxu0 0.0
    %230 = vmatpush1.msra.mxu0 0.0
    %231 = vmatprep.subr.mxu0 0.0
    %232 = vmatpush1.msra.mxu0 0.0
    %233 = vmatprep.subr.mxu0 0.0
    %234 = vmatpush1.msra.mxu0 0.0
    %235 = vmatprep.subr.mxu0 0.0
    %236 = vmatpush1.msra.mxu0 0.0
    %237 = vmatprep.subr.mxu0 0.0
    %238 = vmatpush1.msra.mxu0 0.0
    %239 = vmatprep.subr.mxu0 0.0
    %240 = vmatpush1.msra.mxu0 0.0
    %241 = vmatprep.subr.mxu0 0.0
    %242 = vmatpush1.msra.mxu0 %v206
    %243 = vmatprep.subr.mxu0 0.0
    %244 = vmatpush2.msra.mxu0 0.0
    %245 = vmatprep.subr.mxu0 0.0
    %246 = vmatpush2.msra.mxu0 0.0
    %247 = vmatprep.subr.mxu0 0.0
    %248 = vmatpush2.msra.mxu0 0.0
    %249 = vmatprep.subr.mxu0 0.0
    %250 = vmatpush2.msra.mxu0 0.0
    %251 = vmatprep.subr.mxu0 0.0
    %252 = vmatpush2.msra.mxu0 0.0
    %253 = vmatprep.subr.mxu0 0.0
    %254 = vmatpush2.msra.mxu0 0.0
    %255 = vmatprep.subr.mxu0 0.0
    %256 = vmatpush2.msra.mxu0 0.0
    %257 = vmatprep.subr.mxu0 0.0
    %258 = vmatpush2.msra.mxu0 0.0
    %259 = vmatprep.subr.mxu0 0.0
    %260 = vmatpush2.msra.mxu0 0.0
    %261 = vmatprep.subr.mxu0 0.0
    %262 = vmatpush2.msra.mxu0 0.0
    %263 = vmatprep.subr.mxu0 0.0
    %264 = vmatpush2.msra.mxu0 0.0
    %265 = vmatprep.subr.mxu0 0.0
    %266 = vmatpush2.msra.mxu0 0.0
    %267 = vmatprep.subr.mxu0 0.0
    %268 = vmatpush2.msra.mxu0 0.0
    %269 = vmatprep.subr.mxu0 0.0
    %270 = vmatpush2.msra.mxu0 0.0
    %271 = vmatprep.subr.mxu0 0.0
    %272 = vmatpush2.msra.mxu0 0.0
    %273 = vmatprep.subr.mxu0 0.0
    %274 = vmatpush2.msra.mxu0 0.0
    %275 = vmatprep.mubr.f32.mxu0 0.0
    %276 = vmatmul.mubr.f32.gmra.mxu0 %v209
    %v277 = vpop.f32.mrf.mxu0
    %v278 = vadd.f32 0.0, %v277
    %v279 = vpop.f32.mrf.mxu0
    %280 = vdwg.mxu0
    %vm281 = vcmask 261120
    %v283 = vsel %vm281, %v198, 0
    %285 = vmatprep.subr.mxu0 0.0
    %286 = vmatpush1.msra.mxu0 0.0
    %287 = vmatprep.subr.mxu0 0.0
    %288 = vmatpush1.msra.mxu0 0.0
    %289 = vmatprep.subr.mxu0 0.0
    %290 = vmatpush1.msra.mxu0 0.0
    %291 = vmatprep.subr.mxu0 0.0
    %292 = vmatpush1.msra.mxu0 0.0
    %293 = vmatprep.subr.mxu0 0.0
    %294 = vmatpush1.msra.mxu0 0.0
    %295 = vmatprep.subr.mxu0 0.0
    %296 = vmatpush1.msra.mxu0 0.0
    %297 = vmatprep.subr.mxu0 0.0
    %298 = vmatpush1.msra.mxu0 0.0
    %299 = vmatprep.subr.mxu0 0.0
    %300 = vmatpush1.msra.mxu0 0.0
    %301 = vmatprep.subr.mxu0 0.0
    %302 = vmatpush1.msra.mxu0 0.0
    %303 = vmatprep.subr.mxu0 0.0
    %304 = vmatpush1.msra.mxu0 0.0
    %305 = vmatprep.subr.mxu0 0.0
    %306 = vmatpush1.msra.mxu0 0.0
    %307 = vmatprep.subr.mxu0 0.0
    %308 = vmatpush1.msra.mxu0 0.0
    %309 = vmatprep.subr.mxu0 0.0
    %310 = vmatpush1.msra.mxu0 %v204
    %311 = vmatprep.subr.mxu0 0.0
    %312 = vmatpush1.msra.mxu0 %v203
    %313 = vmatprep.subr.mxu0 0.0
    %314 = vmatpush1.msra.mxu0 %v202
    %315 = vmatprep.subr.mxu0 0.0
    %316 = vmatpush1.msra.mxu0 %v201
    %317 = vmatprep.subr.mxu0 0.0
    %318 = vmatpush2.msra.mxu0 0.0
    %319 = vmatprep.subr.mxu0 0.0
    %320 = vmatpush2.msra.mxu0 0.0
    %321 = vmatprep.subr.mxu0 0.0
    %322 = vmatpush2.msra.mxu0 0.0
    %323 = vmatprep.subr.mxu0 0.0
    %324 = vmatpush2.msra.mxu0 0.0
    %325 = vmatprep.subr.mxu0 0.0
    %326 = vmatpush2.msra.mxu0 0.0
    %327 = vmatprep.subr.mxu0 0.0
    %328 = vmatpush2.msra.mxu0 0.0
    %329 = vmatprep.subr.mxu0 0.0
    %330 = vmatpush2.msra.mxu0 0.0
    %331 = vmatprep.subr.mxu0 0.0
    %332 = vmatpush2.msra.mxu0 0.0
    %333 = vmatprep.subr.mxu0 0.0
    %334 = vmatpush2.msra.mxu0 0.0
    %335 = vmatprep.subr.mxu0 0.0
    %336 = vmatpush2.msra.mxu0 0.0
    %337 = vmatprep.subr.mxu0 0.0
    %338 = vmatpush2.msra.mxu0 0.0
    %339 = vmatprep.subr.mxu0 0.0
    %340 = vmatpush2.msra.mxu0 0.0
    %341 = vmatprep.subr.mxu0 0.0
    %342 = vmatpush2.msra.mxu0 0.0
    %343 = vmatprep.subr.mxu0 0.0
    %344 = vmatpush2.msra.mxu0 0.0
    %345 = vmatprep.subr.mxu0 0.0
    %346 = vmatpush2.msra.mxu0 0.0
    %347 = vmatprep.subr.mxu0 0.0
    %348 = vmatpush2.msra.mxu0 0.0
    %349 = vmatprep.mubr.f32.mxu0 0.0
    %350 = vmatmul.mubr.f32.gmra.mxu0 %v283
    %v351 = vpop.f32.mrf.mxu0
    %v352 = vadd.f32 %v278, %v351
    %v353 = vpop.f32.mrf.mxu0
    %354 = vdwg.mxu0
    %v355 = vld [vmem:[%s6] sm:$0x1]
    %v357 = vlaneseq
    %v358 = vshrl.u32 %v357, 7
    %v359 = vsub.s32 0, %v358
    %v360 = vrot.slane %v355, %v359
    %v362 = vadd.f32 %v352, %v360
    %v363 = vmax.f32 %v362, 0.0
    %v364 = vld [vmem:[#allocation10] sm:$0xff]
    %v365 = vld [vmem:[#allocation10 + $0x8] sm:$0xff]
    %v366 = vld [vmem:[#allocation10 + $0x10] sm:$0xff]
    %v367 = vld [vmem:[#allocation10 + $0x18] sm:$0xff]
    %v368 = vld [vmem:[%s8] sm:$0x1]
    %v370 = vlaneseq
    %v371 = vshrl.u32 %v370, 7
    %v372 = vsub.s32 0, %v371
    %v373 = vrot.slane %v368, %v372
    %v376 = vsel %vm281, %v363, 0
    %378 = vmatprep.subr.mxu0 0.0
    %379 = vmatpush1.msra.mxu0 0.0
    %380 = vmatprep.subr.mxu0 0.0
    %381 = vmatpush1.msra.mxu0 0.0
    %382 = vmatprep.subr.mxu0 0.0
    %383 = vmatpush1.msra.mxu0 0.0
    %384 = vmatprep.subr.mxu0 0.0
    %385 = vmatpush1.msra.mxu0 0.0
    %386 = vmatprep.subr.mxu0 0.0
    %387 = vmatpush1.msra.mxu0 0.0
    %388 = vmatprep.subr.mxu0 0.0
    %389 = vmatpush1.msra.mxu0 0.0
    %390 = vmatprep.subr.mxu0 0.0
    %391 = vmatpush1.msra.mxu0 0.0
    %392 = vmatprep.subr.mxu0 0.0
    %393 = vmatpush1.msra.mxu0 0.0
    %394 = vmatprep.subr.mxu0 0.0
    %395 = vmatpush1.msra.mxu0 0.0
    %396 = vmatprep.subr.mxu0 0.0
    %397 = vmatpush1.msra.mxu0 0.0
    %398 = vmatprep.subr.mxu0 0.0
    %399 = vmatpush1.msra.mxu0 0.0
    %400 = vmatprep.subr.mxu0 0.0
    %401 = vmatpush1.msra.mxu0 0.0
    %402 = vmatprep.subr.mxu0 0.0
    %403 = vmatpush1.msra.mxu0 %v367
    %404 = vmatprep.subr.mxu0 0.0
    %405 = vmatpush1.msra.mxu0 %v366
    %406 = vmatprep.subr.mxu0 0.0
    %407 = vmatpush1.msra.mxu0 %v365
    %408 = vmatprep.subr.mxu0 0.0
    %409 = vmatpush1.msra.mxu0 %v364
    %410 = vmatprep.subr.mxu0 0.0
    %411 = vmatpush2.msra.mxu0 0.0
    %412 = vmatprep.subr.mxu0 0.0
    %413 = vmatpush2.msra.mxu0 0.0
    %414 = vmatprep.subr.mxu0 0.0
    %415 = vmatpush2.msra.mxu0 0.0
    %416 = vmatprep.subr.mxu0 0.0
    %417 = vmatpush2.msra.mxu0 0.0
    %418 = vmatprep.subr.mxu0 0.0
    %419 = vmatpush2.msra.mxu0 0.0
    %420 = vmatprep.subr.mxu0 0.0
    %421 = vmatpush2.msra.mxu0 0.0
    %422 = vmatprep.subr.mxu0 0.0
    %423 = vmatpush2.msra.mxu0 0.0
    %424 = vmatprep.subr.mxu0 0.0
    %425 = vmatpush2.msra.mxu0 0.0
    %426 = vmatprep.subr.mxu0 0.0
    %427 = vmatpush2.msra.mxu0 0.0
    %428 = vmatprep.subr.mxu0 0.0
    %429 = vmatpush2.msra.mxu0 0.0
    %430 = vmatprep.subr.mxu0 0.0
    %431 = vmatpush2.msra.mxu0 0.0
    %432 = vmatprep.subr.mxu0 0.0
    %433 = vmatpush2.msra.mxu0 0.0
    %434 = vmatprep.subr.mxu0 0.0
    %435 = vmatpush2.msra.mxu0 0.0
    %436 = vmatprep.subr.mxu0 0.0
    %437 = vmatpush2.msra.mxu0 0.0
    %438 = vmatprep.subr.mxu0 0.0
    %439 = vmatpush2.msra.mxu0 0.0
    %440 = vmatprep.subr.mxu0 0.0
    %441 = vmatpush2.msra.mxu0 0.0
    %442 = vmatprep.mubr.f32.mxu0 0.0
    %443 = vmatmul.mubr.f32.gmra.mxu0 %v376
    %v444 = vpop.f32.mrf.mxu0
    %v445 = vadd.f32 %v373, %v444
    %v446 = vpop.f32.mrf.mxu0
    %447 = vdwg.mxu0
    %v448 = vmax.f32 %v445, 0.0
    %v449 = vld [vmem:[#allocation11] sm:$0xff]
    %v450 = vld [vmem:[#allocation11 + $0x8] sm:$0xff]
    %v451 = vld [vmem:[#allocation11 + $0x10] sm:$0xff]
    %v452 = vld [vmem:[#allocation11 + $0x18] sm:$0xff]
    %v453 = vld [vmem:[%s10] sm:$0x1]
    %v455 = vlaneseq
    %v456 = vshrl.u32 %v455, 7
    %v457 = vsub.s32 0, %v456
    %v458 = vrot.slane %v453, %v457
    %v461 = vsel %vm281, %v448, 0
    %463 = vmatprep.subr.mxu0 0.0
    %464 = vmatpush1.msra.mxu0 0.0
    %465 = vmatprep.subr.mxu0 0.0
    %466 = vmatpush1.msra.mxu0 0.0
    %467 = vmatprep.subr.mxu0 0.0
    %468 = vmatpush1.msra.mxu0 0.0
    %469 = vmatprep.subr.mxu0 0.0
    %470 = vmatpush1.msra.mxu0 0.0
    %471 = vmatprep.subr.mxu0 0.0
    %472 = vmatpush1.msra.mxu0 0.0
    %473 = vmatprep.subr.mxu0 0.0
    %474 = vmatpush1.msra.mxu0 0.0
    %475 = vmatprep.subr.mxu0 0.0
    %476 = vmatpush1.msra.mxu0 0.0
    %477 = vmatprep.subr.mxu0 0.0
    %478 = vmatpush1.msra.mxu0 0.0
    %479 = vmatprep.subr.mxu0 0.0
    %480 = vmatpush1.msra.mxu0 0.0
    %481 = vmatprep.subr.mxu0 0.0
    %482 = vmatpush1.msra.mxu0 0.0
    %483 = vmatprep.subr.mxu0 0.0
    %484 = vmatpush1.msra.mxu0 0.0
    %485 = vmatprep.subr.mxu0 0.0
    %486 = vmatpush1.msra.mxu0 0.0
    %487 = vmatprep.subr.mxu0 0.0
    %488 = vmatpush1.msra.mxu0 %v452
    %489 = vmatprep.subr.mxu0 0.0
    %490 = vmatpush1.msra.mxu0 %v451
    %491 = vmatprep.subr.mxu0 0.0
    %492 = vmatpush1.msra.mxu0 %v450
    %493 = vmatprep.subr.mxu0 0.0
    %494 = vmatpush1.msra.mxu0 %v449
    %495 = vmatprep.subr.mxu0 0.0
    %496 = vmatpush2.msra.mxu0 0.0
    %497 = vmatprep.subr.mxu0 0.0
    %498 = vmatpush2.msra.mxu0 0.0
    %499 = vmatprep.subr.mxu0 0.0
    %500 = vmatpush2.msra.mxu0 0.0
    %501 = vmatprep.subr.mxu0 0.0
    %502 = vmatpush2.msra.mxu0 0.0
    %503 = vmatprep.subr.mxu0 0.0
    %504 = vmatpush2.msra.mxu0 0.0
    %505 = vmatprep.subr.mxu0 0.0
    %506 = vmatpush2.msra.mxu0 0.0
    %507 = vmatprep.subr.mxu0 0.0
    %508 = vmatpush2.msra.mxu0 0.0
    %509 = vmatprep.subr.mxu0 0.0
    %510 = vmatpush2.msra.mxu0 0.0
    %511 = vmatprep.subr.mxu0 0.0
    %512 = vmatpush2.msra.mxu0 0.0
    %513 = vmatprep.subr.mxu0 0.0
    %514 = vmatpush2.msra.mxu0 0.0
    %515 = vmatprep.subr.mxu0 0.0
    %516 = vmatpush2.msra.mxu0 0.0
    %517 = vmatprep.subr.mxu0 0.0
    %518 = vmatpush2.msra.mxu0 0.0
    %519 = vmatprep.subr.mxu0 0.0
    %520 = vmatpush2.msra.mxu0 0.0
    %521 = vmatprep.subr.mxu0 0.0
    %522 = vmatpush2.msra.mxu0 0.0
    %523 = vmatprep.subr.mxu0 0.0
    %524 = vmatpush2.msra.mxu0 0.0
    %525 = vmatprep.subr.mxu0 0.0
    %526 = vmatpush2.msra.mxu0 0.0
    %527 = vmatprep.mubr.f32.mxu0 0.0
    %528 = vmatmul.mubr.f32.gmra.mxu0 %v461
    %v529 = vpop.f32.mrf.mxu0
    %v530 = vadd.f32 %v458, %v529
    %v531 = vpop.f32.mrf.mxu0
    %532 = vdwg.mxu0
    %533 = vst [vmem:[#allocation13] sm:$0x3] %v530
    // Predicated region
    $region70: #{tpu_custom_call.1} parent=1 // pred_check
      _
    $region71: #{tpu_custom_call.1} parent=1 // pred_check_branch
      %535 = sbr.rel (0) target = $region73
    $region72: #{tpu_custom_call.1} parent=1 // pred_region
      %s537 = ssub.s32 32, 32
      %538 = vsyncadd [#allocation4], %s537
      %s540 = sshll.u32 [#allocation13], 4
      %s541 = int_to_ptr.vmem [resolvable:$true] %s540
      %543 = dma.vmem_to_hbm [thread:$0]  %s541, 32, %s11, [#allocation4]
    $region73: #{tpu_custom_call.1} parent=1 // pred_fallthru
      _
    // Predicated region
    $region74: #{tpu_custom_call.1} parent=1 // pred_check
      _
    $region75: #{tpu_custom_call.1} parent=1 // pred_check_branch
      %545 = sbr.rel (0) target = $region77
    $region76: #{tpu_custom_call.1} parent=1 // pred_region
      %546 = dma.done [#allocation4], 32
    $region77: #{tpu_custom_call.1} parent=1 // pred_fallthru
      _
    %547 = vsyncpa [#allocation3], 1
    %548 = vsyncpa [#allocation6], 1
    %549 = vsyncpa [#allocation9], 1
    %550 = vsyncpa [#allocation12], 1
    %551 = vsyncpa [#allocation4], 1

</llo_original>
